<compile_context>
chip_gen: v5e
topology: v5e:2x2
jax: 0.10.0
libtpu: 0.0.40
codegen_flags: <defaults>
</compile_context>

<pallas_src>
import functools
import math

import numpy as np
import jax
import jax.numpy as jnp
from jax import lax
from jax.experimental import pallas as pl
from jax.experimental.pallas import tpu as pltpu

_NEG_BIG = -1e30       # finite "-inf": avoids NaN from (-inf)-(-inf) in online softmax
_NORM_EPS_SQ = 1e-24   # == (1e-12)**2 : F.normalize eps applied to the squared norm


def ln_stats_kernel(x_ref, o_ref):
    """WithBias LayerNorm statistics over the channel dim, per spatial position.

    Output row 0 = mean over channels, row 1 = 1/sqrt(var + 1e-5).
    The affine apply happens fused inside the attention kernel.
    """
    x = x_ref[0].astype(jnp.float32)                          # (C, Tn)
    mu = jnp.mean(x, axis=0, keepdims=True)                   # (1, Tn)
    var = jnp.mean((x - mu) ** 2, axis=0, keepdims=True)      # (1, Tn)
    o_ref[0, :, :] = jnp.concatenate([mu, lax.rsqrt(var + 1e-5)], axis=0)


def refine_attn_kernel(cnt_ref,                                     # scalar prefetch (B*nk,) i32
                       x_ref, st_ref, lnw_ref, lnb_ref, mk_ref,     # inputs
                       out_ref,                                     # output
                       m_scr, l_scr, acc_scr, qn_scr, xn_scr,       # VMEM scratch
                       *, block_k, use_bf16_exp):
    b = pl.program_id(0)
    kt = pl.program_id(2)
    nk = pl.num_programs(2)

    # ---- init (first key tile of each (batch, head)): fused LayerNorm apply,
    #      L2-normalized queries (bf16) and online-softmax statistics.
    @pl.when(kt == 0)
    def _init():
        xh = x_ref[0].astype(jnp.float32)                     # (ch, N) raw features
        mu = st_ref[0, 0:1, :]                                # (1, N)
        istd = st_ref[0, 1:2, :]                              # (1, N)
        xn = (xh - mu) * istd * lnw_ref[...] + lnb_ref[...]   # (ch, N)
        xn_scr[...] = xn
        sq = jnp.sum(xn * xn, axis=0, keepdims=True)          # (1, N)
        qn_scr[...] = (xn * lax.rsqrt(jnp.maximum(sq, _NORM_EPS_SQ))
                       ).astype(jnp.bfloat16)
        m_scr[...] = jnp.full_like(m_scr, _NEG_BIG)
        l_scr[...] = jnp.zeros_like(l_scr)
        acc_scr[...] = jnp.zeros_like(acc_scr)

    # ---- online-softmax update for this key tile.  All operands are already
    #      resident in VMEM (no per-tile DMA), so a tile with zero active
    #      mask_e keys is skipped at essentially the grid-step cost.
    @pl.when(cnt_ref[b * nk + kt] > 0)
    def _tile():
        koff = pl.multiple_of(kt * block_k, block_k)
        v = xn_scr[:, pl.ds(koff, block_k)]                   # (ch, Tk) f32 values
        me_row = mk_ref[0, 1:2, pl.ds(koff, block_k)]         # (1, Tk) mask_e
        # (Tk, 1) additive key bias, derived from the resident mask (tiny XLU relayout)
        bias = jnp.where(jnp.transpose(me_row, (1, 0)) > 0.5, 0.0, _NEG_BIG)
        ksq = jnp.sum(v * v, axis=0, keepdims=True)
        kn = (v * lax.rsqrt(jnp.maximum(ksq, _NORM_EPS_SQ))).astype(jnp.bfloat16)
        # scores with keys on sublanes, queries on lanes -> softmax stats are (1, N)
        s = lax.dot_general(kn, qn_scr[...],
                            (((0,), (0,)), ((), ())),
                            preferred_element_type=jnp.float32)      # (Tk, N)
        s = s + bias
        m_prev = m_scr[...]
        m_new = jnp.maximum(m_prev, jnp.max(s, axis=0, keepdims=True))
        alpha = jnp.exp(m_prev - m_new)
        diff = s - m_new
        if use_bf16_exp:
            # bf16 EUP exp on v6e/v7x; l still accumulated in f32
            p = jnp.exp(diff.astype(jnp.bfloat16))            # (Tk, N) bf16
            psum = jnp.sum(p.astype(jnp.float32), axis=0, keepdims=True)
        else:
            p32 = jnp.exp(diff)
            psum = jnp.sum(p32, axis=0, keepdims=True)
            p = p32.astype(jnp.bfloat16)
        l_scr[...] = alpha * l_scr[...] + psum
        acc_scr[...] = alpha * acc_scr[...] + lax.dot_general(
            v.astype(jnp.bfloat16), p,
            (((1,), (0,)), ((), ())),
            preferred_element_type=jnp.float32)               # (ch, N)
        m_scr[...] = m_new

    # ---- finalize on the last key tile: part-1 normalize + mask_d select,
    #      part-2 channel attention, combine, direct per-head store.
    @pl.when(kt == nk - 1)
    def _fin():
        xn = xn_scr[...]                                      # (ch, N) f32
        md = mk_ref[0, 0:1, :]                                # (1, N)
        me = mk_ref[0, 1:2, :]                                # (1, N)

        # part 1: out1 = attn1 @ v1 + q1n ; keep xn where mask_d == 0.
        # l >= 1 whenever any mask_e key is active; the max(l, 1) guard makes the
        # all-empty-mask_e case degrade to out1 = qn (matching PyTorch) with no Inf/NaN.
        l = jnp.maximum(l_scr[...], 1.0)
        out1 = acc_scr[...] * pl.reciprocal(l, approx=True) \
            + qn_scr[...].astype(jnp.float32)
        out_sa = jnp.where(md > 0.5, out1, xn)

        # part 2: channel attention on mask-suppressed features.
        # The two normalize+cast chains are sequenced to bound live (ch, N) f32 ranges.
        y2h = xn * (1.0 - md)                                 # keys / values
        k2n = (y2h * lax.rsqrt(jnp.maximum(
            jnp.sum(y2h * y2h, axis=1, keepdims=True), _NORM_EPS_SQ))
               ).astype(jnp.bfloat16)
        y2h_bf = y2h.astype(jnp.bfloat16)
        y1h = xn * (1.0 - me)                                 # queries
        q2n = y1h * lax.rsqrt(jnp.maximum(
            jnp.sum(y1h * y1h, axis=1, keepdims=True), _NORM_EPS_SQ))
        a2 = lax.dot_general(q2n.astype(jnp.bfloat16), k2n,
                             (((1,), (1,)), ((), ())),
                             preferred_element_type=jnp.float32)     # (ch, ch)
        a2 = a2 - jnp.max(a2, axis=1, keepdims=True)
        e2 = jnp.exp(a2)
        attn2 = e2 * pl.reciprocal(jnp.sum(e2, axis=1, keepdims=True), approx=True)
        out2 = lax.dot_general(attn2.astype(jnp.bfloat16), y2h_bf,
                               (((1,), (0,)), ((), ())),
                               preferred_element_type=jnp.float32) + q2n  # (ch, N)

        out_ref[0, :, :] = (xn + out_sa + out2).astype(out_ref.dtype)


def _device_kind():
    try:
        return jax.devices()[0].device_kind.lower()
    except Exception:
        return ""


def refine_attention(x, mask_d, mask_e, ln_weight, ln_bias, num_heads, *,
                     block_k=None):
    """x: (B, C, H, W) (any float dtype); mask_d/mask_e: (B, 1, H, W) binary."""
    B, C, H, W = x.shape
    N = H * W
    assert C % num_heads == 0
    ch = C // num_heads
    assert ch % 8 == 0, "channels per head must be a multiple of 8"
    assert N % 128 == 0, "H*W must be a multiple of 128 (lane-dense tiles)"

    kind = _device_kind()
    is_v7 = ("v7" in kind) or ("7x" in kind)
    use_bf16_exp = is_v7 or ("v6" in kind)      # no bf16 VPU/EUP on v5e and older
    if is_v7:
        vmem_limit = 44 * 1024 * 1024           # 64 MiB physical per TC on v7x
    elif ("v4" in kind) or ("v5" in kind) or ("v6" in kind):
        vmem_limit = 64 * 1024 * 1024           # 128 MiB physical
    else:
        vmem_limit = None

    # Key-tile size: bounded by the (Tk, N) score/prob temporaries in VMEM.
    if block_k is None:
        budget = (18 if is_v7 else 40) * 1024 * 1024
        cap = max(128, (budget // (N * 4 * 3)) // 128 * 128)
        block_k = min(512 if is_v7 else 1024, cap)
    block_k = max(128, (min(block_k, N) // 128) * 128)
    while block_k > 128 and N % block_k != 0:
        block_k -= 128
    assert N % block_k == 0
    nk = N // block_k
    # TODO(synk): for very large N (>~8K) add a query-tile grid axis so the
    # resident (ch, N) scratch and (Tk, N) temporaries stay bounded on v7x's
    # 64 MiB VMEM, instead of only shrinking block_k.

    xf = x.reshape(B, C, N)                      # native dtype; upcast in-kernel
    # packed masks: row 0 = mask_d, row 1 = mask_e  (single resident stream)
    masks = jnp.stack([mask_d.reshape(B, N), mask_e.reshape(B, N)],
                      axis=1).astype(jnp.float32)             # (B, 2, N)
    # flattened per-(batch, key-tile) active-key counts -> skip empty key tiles
    tile_cnt = (masks[:, 1].reshape(B, nk, block_k) > 0.5
                ).sum(axis=-1).astype(jnp.int32).reshape(B * nk)

    wv = ln_weight.reshape(C, 1).astype(jnp.float32)
    bv = ln_bias.reshape(C, 1).astype(jnp.float32)

    # ---- kernel 1: LayerNorm statistics only (tiny (B, 2, N) output) ----
    ln_block = math.gcd(N, 4096)
    stats = pl.pallas_call(
        ln_stats_kernel,
        out_shape=jax.ShapeDtypeStruct((B, 2, N), jnp.float32),
        grid=(B, N // ln_block),
        in_specs=[pl.BlockSpec((1, C, ln_block), lambda b, n: (b, 0, n))],
        out_specs=pl.BlockSpec((1, 2, ln_block), lambda b, n: (b, 0, n)),
        compiler_params=pltpu.CompilerParams(
            dimension_semantics=("parallel", "parallel")),
    )(xf)

    # ---- kernel 2: fused LN-apply + flash-style refine attention ----
    kernel = functools.partial(refine_attn_kernel, block_k=block_k,
                               use_bf16_exp=use_bf16_exp)
    grid_spec = pltpu.PrefetchScalarGridSpec(
        num_scalar_prefetch=1,
        grid=(B, num_heads, nk),
        in_specs=[
            # raw (ch, N) head slice of x, resident over the key-tile axis
            pl.BlockSpec((1, ch, N), lambda b, h, k, cnt: (b, h, 0)),
            # LayerNorm statistics (mu, inv_std)
            pl.BlockSpec((1, 2, N), lambda b, h, k, cnt: (b, 0, 0)),
            # per-head LayerNorm affine params
            pl.BlockSpec((ch, 1), lambda b, h, k, cnt: (h, 0)),
            pl.BlockSpec((ch, 1), lambda b, h, k, cnt: (h, 0)),
            # packed masks (mask_d, mask_e)
            pl.BlockSpec((1, 2, N), lambda b, h, k, cnt: (b, 0, 0)),
        ],
        out_specs=pl.BlockSpec((1, ch, N), lambda b, h, k, cnt: (b, h, 0)),
        scratch_shapes=[
            pltpu.VMEM((1, N), jnp.float32),      # running max
            pltpu.VMEM((1, N), jnp.float32),      # running sum (f32)
            pltpu.VMEM((ch, N), jnp.float32),     # output accumulator
            pltpu.VMEM((ch, N), jnp.bfloat16),    # normalized queries (bf16)
            pltpu.VMEM((ch, N), jnp.float32),     # LayerNormed head features
        ],
    )
    out = pl.pallas_call(
        kernel,
        out_shape=jax.ShapeDtypeStruct((B, C, N), x.dtype),
        grid_spec=grid_spec,
        compiler_params=pltpu.CompilerParams(
            dimension_semantics=("parallel", "parallel", "arbitrary"),
            vmem_limit_bytes=vmem_limit),
    )(tile_cnt, xf, stats, wv, bv, masks)
    return out.reshape(B, C, H, W)


def reference_forward(x, mask_d, mask_e, ln_w, ln_b, num_heads):
    """NumPy reference that follows the PyTorch gather/scatter path."""
    x = np.asarray(x, np.float32)
    mask_d = np.asarray(mask_d, np.float32)
    mask_e = np.asarray(mask_e, np.float32)
    B, C, H, W = x.shape
    N = H * W
    ch = C // num_heads

    xt = x.reshape(B, C, N)
    mu = xt.mean(axis=1, keepdims=True)
    var = xt.var(axis=1, keepdims=True)
    xn = (xt - mu) / np.sqrt(var + 1e-5) * ln_w.reshape(1, C, 1) \
        + ln_b.reshape(1, C, 1)

    mdf = mask_d.reshape(B, N)
    mef = mask_e.reshape(B, N)

    out_sa = xn.copy()
    for i in range(B):
        idx_d = np.where(mdf[i] == 1)[0]
        idx_e = np.where(mef[i] == 1)[0]
        z_d = xn[i][:, idx_d]
        z_e = xn[i][:, idx_e]
        out1_full = np.zeros((C, idx_d.shape[0]), np.float32)
        for hd in range(num_heads):
            q1 = z_d[hd * ch:(hd + 1) * ch].T
            k1 = z_e[hd * ch:(hd + 1) * ch].T
            v1 = k1
            q1n = q1 / np.maximum(np.linalg.norm(q1, axis=-1, keepdims=True), 1e-12)
            k1n = k1 / np.maximum(np.linalg.norm(k1, axis=-1, keepdims=True), 1e-12)
            a = q1n @ k1n.T
            a = np.exp(a - a.max(axis=-1, keepdims=True))
            a = a / a.sum(axis=-1, keepdims=True)
            out1_full[hd * ch:(hd + 1) * ch] = (a @ v1 + q1n).T
        out_sa[i][:, idx_d] = out1_full

    y1 = xn * (1.0 - mef[:, None, :])
    y2 = xn * (1.0 - mdf[:, None, :])
    out2 = np.zeros_like(xn)
    for i in range(B):
        for hd in range(num_heads):
            q2 = y1[i, hd * ch:(hd + 1) * ch]
            k2 = y2[i, hd * ch:(hd + 1) * ch]
            v2 = k2
            q2n = q2 / np.maximum(np.linalg.norm(q2, axis=-1, keepdims=True), 1e-12)
            k2n = k2 / np.maximum(np.linalg.norm(k2, axis=-1, keepdims=True), 1e-12)
            a = q2n @ k2n.T
            a = np.exp(a - a.max(axis=-1, keepdims=True))
            a = a / a.sum(axis=-1, keepdims=True)
            out2[i, hd * ch:(hd + 1) * ch] = a @ v2 + q2n

    return (xn + out_sa + out2).reshape(B, C, H, W)


if __name__ == "__main__":
    B, C, H, W = 2, 16, 16, 16        # N = H*W = 256 -> two key tiles of 128
    num_heads = 2

    key = jax.random.PRNGKey(0)
    kx, kd, ke = jax.random.split(key, 3)
    x = jax.random.normal(kx, (B, C, H, W), dtype=jnp.float32)
    mask_d = jax.random.bernoulli(kd, 0.3, (B, 1, H, W)).astype(jnp.float32)
    mask_e = jax.random.bernoulli(ke, 0.3, (B, 1, H, W)).astype(jnp.float32)
    # make the second key tile of batch 1 completely empty to exercise the
    # scalar-prefetch tile-skip path and the multi-tile online softmax
    mask_e = mask_e.at[1, :, H // 2:, :].set(0.0)
    # guarantee at least one active position per batch in each mask
    mask_d = mask_d.at[:, :, 0, 0].set(1.0)
    mask_e = mask_e.at[:, :, 0, 1].set(1.0)

    # LayerNorm params exactly as the module's __init__ (WithBias type).
    ln_w = jnp.ones((C,), jnp.float32)
    ln_b = jnp.zeros((C,), jnp.float32)
    # NOTE: self.project_out (1x1 Conv2d) is defined in __init__ but never used
    # in forward(), so it is intentionally not instantiated here.

    out = refine_attention(x, mask_d, mask_e, ln_w, ln_b, num_heads, block_k=128)
    out = jax.block_until_ready(out)

    ref = reference_forward(np.array(x), np.array(mask_d), np.array(mask_e),
                            np.array(ln_w), np.array(ln_b), num_heads)
    # bf16 MXU operands / bf16 exp with f32 accumulation -> bf16-level tolerance
    np.testing.assert_allclose(np.array(out), ref, rtol=5e-2, atol=5e-2)
    print("KERNEL_OK")
</pallas_src>

<mosaic_0001>
module attributes {stable_mosaic.version = 11 : i64} {
  func.func @ln_stats_kernel(%arg0: i32, %arg1: i32, %arg2: memref<1x16x256xf32, #tpu.memory_space<vmem>>, %arg3: memref<1x2x256xf32, #tpu.memory_space<vmem>>) attributes {dimension_semantics = [#tpu.dimension_semantics<parallel>, #tpu.dimension_semantics<parallel>], iteration_bounds = array<i64: 2, 1>, scalar_prefetch = 0 : i64, scratch_operands = 0 : i64, tpu.core_type = #tpu.core_type<tc>, window_params = [{transform_indices = @transform_0, window_bounds = array<i64: 1, 16, 256>}, {transform_indices = @transform_1, window_bounds = array<i64: 1, 2, 256>}]} {
    %c0 = arith.constant 0 : index
    %c0_0 = arith.constant 0 : index
    %c0_1 = arith.constant 0 : index
    %0 = vector.load %arg2[%c0, %c0_0, %c0_1] : memref<1x16x256xf32, #tpu.memory_space<vmem>>, vector<1x16x256xf32>
    %1 = vector.shape_cast %0 : vector<1x16x256xf32> to vector<16x256xf32>
    %cst = arith.constant dense<0.000000e+00> : vector<256xf32>
    %2 = vector.multi_reduction <add>, %1, %cst [0] : vector<16x256xf32> to vector<256xf32>
    %3 = vector.shape_cast %2 : vector<256xf32> to vector<1x256xf32>
    %cst_2 = arith.constant 1.600000e+01 : f32
    %4 = vector.broadcast %cst_2 : f32 to vector<1x256xf32>
    %5 = arith.divf %3, %4 : vector<1x256xf32>
    %6 = vector.broadcast %5 : vector<1x256xf32> to vector<16x256xf32>
    %7 = arith.subf %1, %6 : vector<16x256xf32>
    %8 = arith.mulf %7, %7 : vector<16x256xf32>
    %cst_3 = arith.constant dense<0.000000e+00> : vector<256xf32>
    %9 = vector.multi_reduction <add>, %8, %cst_3 [0] : vector<16x256xf32> to vector<256xf32>
    %10 = vector.shape_cast %9 : vector<256xf32> to vector<1x256xf32>
    %cst_4 = arith.constant 1.600000e+01 : f32
    %11 = vector.broadcast %cst_4 : f32 to vector<1x256xf32>
    %12 = arith.divf %10, %11 : vector<1x256xf32>
    %cst_5 = arith.constant 9.99999974E-6 : f32
    %13 = vector.broadcast %cst_5 : f32 to vector<1x256xf32>
    %14 = arith.addf %12, %13 : vector<1x256xf32>
    %15 = math.rsqrt %14 : vector<1x256xf32>
    %16 = tpu.concatenate %5, %15 in 0 : vector<1x256xf32>, vector<1x256xf32> -> vector<2x256xf32>
    %c0_6 = arith.constant 0 : index
    %c0_7 = arith.constant 0 : index
    %c0_8 = arith.constant 0 : index
    %17 = vector.load %arg3[%c0_6, %c0_7, %c0_8] : memref<1x2x256xf32, #tpu.memory_space<vmem>>, vector<1x2x256xf32>
    %18 = vector.shape_cast %17 : vector<1x2x256xf32> to vector<2x256xf32>
    %19 = vector.shape_cast %16 : vector<2x256xf32> to vector<1x2x256xf32>
    tpu.vector_store %arg3[%c0_6, %c0_7, %c0_8], %19 {strides = array<i32>} : memref<1x2x256xf32, #tpu.memory_space<vmem>>, vector<1x2x256xf32>,
    return
  }
  func.func @transform_0(%arg0: i32, %arg1: i32) -> (i32, i32, i32) {
    %c0_i32 = arith.constant 0 : i32
    %c0_i32_0 = arith.constant 0 : i32
    return %arg0, %c0_i32, %arg1 : i32, i32, i32
  }
  func.func @transform_1(%arg0: i32, %arg1: i32) -> (i32, i32, i32) {
    %c0_i32 = arith.constant 0 : i32
    %c0_i32_0 = arith.constant 0 : i32
    return %arg0, %c0_i32, %arg1 : i32, i32, i32
  }
}

</mosaic_0001>

<llo_original>
// kernel: tpu_custom_call.1
$region0: #{tpu_custom_call.1}
  #allocation0 [shape = 'u32[]', space=smem, size = 0x4, offset = 0x4, fixed_abs, tag = 'smem constant byte address 0x4 - core index']
  #allocation1 [shape = 'u32[72,128]{1,0:T(1,128)}', space=vmem, size = 0x9000, scoped, tag = 'internal scratch']
  %s0 = inlined_call_operand.hbm [shape: f32[2,16,256], index: 0, kind: input, shape index: {}]
  %s1 = inlined_call_operand.hbm [shape: f32[2,2,256], index: 1, kind: output, shape index: {}]
  %s2 = sld [smem:[#allocation0]]
  $region41: #{tpu_custom_call.1} parent=0
    _
  %s4 = ssub.s32 1, %s2
  %s5 = scalar_select 0, %s4, %s2
  $region1: #{tpu_custom_call.1} parent=0
    #allocation2 [shape = 'u8[32768]{0}', space=vmem, size = 0x8000, scoped, tag = 'input window, operand 0']
    #allocation3 [shape = 's32[2]{0}', space=sflag, size = 0x8, scoped, tag = 'scoped memory for tpu_custom_call.1']
    #allocation4 [shape = 's32[2]{0}', space=sflag, size = 0x8, scoped, tag = 'scoped memory for tpu_custom_call.1']
    #allocation5 [shape = 'u8[4096]{0}', space=vmem, size = 0x1000, scoped, tag = 'output window, operand 0']
    %6 = vsyncpa [#allocation3], 0
    %s7 = scalar_lea.sflag [#allocation3], 1
    %8 = vsyncpa %s7, 0
    %9 = vsyncpa [#allocation4], 0
    %s10 = scalar_lea.sflag [#allocation4], 1
    %11 = vsyncpa %s10, 0
    loop: start=0, step=1, limit=4
    $region2: #{tpu_custom_call.1} parent=1 // loop_pre_header
      _
    $region3: #{tpu_custom_call.1} parent=1 // loop_header
      %s13 = sphi 0, %s17
      %p14 = scmp.ge.s32.totalorder %s13, 4
      %s20 = sphi 0, %s32
      %s21 = sphi 0, %s28
      %s22 = sphi 0, %s20
      %s23 = sphi 0, %s21
      %s24 = sphi 0, %s22
      %s25 = sphi 0, %s23
      %s37 = sphi 0, %s39
      %s40 = sphi 0, %s37
      %s41 = sphi 0, %s40
      %s57 = sphi 0, %s41
      %s65 = sphi 0, %s67
      %s68 = sphi 0, %s65
      %s69 = sphi 0, %s68
      %s85 = sphi 0, %s69
    $region4: #{tpu_custom_call.1} parent=1 // loop_header_branch
      %16 = sbr.rel (%p14) target = $region8
    $region5: #{tpu_custom_call.1} parent=1 // loop_body
      %s18 = ssub.s32 %s13, 1
      %s19 = ssub.s32 %s13, 2
      %s26 = sadd.s32 1, %s21
      %p27 = scmp.ge.s32.totalorder %s26, 1
      %s28 = scalar_select %p27, 0, %s26
      %s29 = sadd.s32 1, %s20
      %s30 = scalar_select %p27, %s29, %s20
      %p31 = scmp.ge.s32.totalorder %s30, 2
      %s32 = scalar_select %p31, 0, %s30
      %s33 = ssub.s32 %s20, %s32
      %s34 = ssub.s32 %s21, %s28
      %s35 = sor.u32 %s33, %s34
      %p36 = scmp.eq.s32.totalorder %s35, 0
      %s38 = sadd.s32 %s37, 1
      %s39 = scalar_select %p36, %s37, %s38
      %p42 = pneg %p36
      %p43 = scmp.eq.s32.totalorder %s13, 1
      %p44 = por %p42, %p43
      %p45 = scmp.ne.s32.totalorder %s37, %s40
      %p46 = scmp.eq.s32.totalorder %s13, 0
      %p47 = por %p45, %p46
      %p48 = scmp.ne.s32.totalorder %s37, %s40
      %p49 = scmp.eq.s32.totalorder %s18, 1
      %p50 = por %p48, %p49
      %p51 = scmp.ne.s32.totalorder %s40, %s41
      %p52 = scmp.eq.s32.totalorder %s18, 0
      %p53 = por %p51, %p52
      %p54 = scmp.ne.s32.totalorder %s40, %s41
      %p55 = scmp.eq.s32.totalorder %s19, 1
      %p56 = por %p54, %p55
      %p58 = scmp.ne.s32.totalorder %s41, %s57
      %p59 = scmp.eq.s32.totalorder %s19, 0
      %p60 = por %p58, %p59
      %s61 = ssub.s32 %s20, %s32
      %s62 = ssub.s32 %s21, %s28
      %s63 = sor.u32 %s61, %s62
      %p64 = scmp.eq.s32.totalorder %s63, 0
      %s66 = sadd.s32 %s65, 1
      %s67 = scalar_select %p64, %s65, %s66
      %p70 = pneg %p64
      %p71 = scmp.eq.s32.totalorder %s13, 1
      %p72 = por %p70, %p71
      %p73 = scmp.ne.s32.totalorder %s65, %s68
      %p74 = scmp.eq.s32.totalorder %s13, 0
      %p75 = por %p73, %p74
      %p76 = scmp.ne.s32.totalorder %s65, %s68
      %p77 = scmp.eq.s32.totalorder %s18, 1
      %p78 = por %p76, %p77
      %p79 = scmp.ne.s32.totalorder %s68, %s69
      %p80 = scmp.eq.s32.totalorder %s18, 0
      %p81 = por %p79, %p80
      %p82 = scmp.ne.s32.totalorder %s68, %s69
      %p83 = scmp.eq.s32.totalorder %s19, 1
      %p84 = por %p82, %p83
      %p86 = scmp.ne.s32.totalorder %s69, %s85
      %p87 = scmp.eq.s32.totalorder %s19, 0
      %p88 = por %p86, %p87
      %p89 = scmp.le.s32.totalorder 1, %s13
      %p90 = scmp.lt.s32.totalorder %s13, 3
      %p91 = pnand %p89, %p90
      %p92 = pneg %p91
      // Predicated region
      $region9: #{tpu_custom_call.1} parent=5 // pred_check
        _
      $region10: #{tpu_custom_call.1} parent=5 // pred_check_branch
        %94 = sbr.rel (%p91) target = $region12
      $region11: #{tpu_custom_call.1} parent=5 // pred_region
        %s95 = ssub.s32 %s13, 1
      $region12: #{tpu_custom_call.1} parent=5 // pred_fallthru
        _
      %p96 = scmp.lt.s32.totalorder %s13, 2
      // Predicated region
      $region13: #{tpu_custom_call.1} parent=5 // pred_check
        %p97 = pneg %p96
      $region14: #{tpu_custom_call.1} parent=5 // pred_check_branch
        %99 = sbr.rel (%p97) target = $region16
      $region15: #{tpu_custom_call.1} parent=5 // pred_region
        // Predicated region
        $region17: #{tpu_custom_call.1} parent=15 // pred_check
          %p100 = pneg %p47
        $region18: #{tpu_custom_call.1} parent=15 // pred_check_branch
          %102 = sbr.rel (%p100) target = $region20
        $region19: #{tpu_custom_call.1} parent=15 // pred_region
          %s103 = sand.u32 %s37, 1
          %s104 = scalar_lea.sflag [#allocation3], %s103
          %s105 = sand.u32 %s37, 1
          %s106 = smul.addr %s105, 32
          %s107 = scalar_lea.vmem [#allocation2], %s106
          %s108 = smul.u32 2, %s21
          %110 = vsyncadd %s104, 0
          %s111 = smul.addr %s20, 4
          %s112 = sadd.s32 %s108, %s111
          %s113 = smul.addr %s112, 8
          %s114 = scalar_lea.hbm %s0, %s113
          %s115 = sshll.u32 %s114, 4
          %s116 = int_to_ptr.hbm [resolvable:$true] %s115
          %s117 = sshll.u32 %s107, 4
          %s118 = int_to_ptr.vmem [resolvable:$true] %s117
          %123 = dma.hbm_to_vmem [thread:$0]  %s116, 512, %s118, %s104, 256, 256, 16
        $region20: #{tpu_custom_call.1} parent=15 // pred_fallthru
          _
      $region16: #{tpu_custom_call.1} parent=5 // pred_fallthru
        _
      %p124 = scmp.le.s32.totalorder 1, %s13
      %p125 = scmp.lt.s32.totalorder %s13, 3
      %p126 = pnand %p124, %p125
      %p127 = pneg %p126
      // Predicated region
      $region21: #{tpu_custom_call.1} parent=5 // pred_check
        _
      $region22: #{tpu_custom_call.1} parent=5 // pred_check_branch
        %129 = sbr.rel (%p126) target = $region24
      $region23: #{tpu_custom_call.1} parent=5 // pred_region
        %s130 = ssub.s32 %s13, 1
        %s131 = sand.u32 %s40, 1
        %s132 = scalar_lea.sflag [#allocation3], %s131
        %s133 = sand.u32 %s40, 1
        %s134 = smul.addr %s133, 32
        %s135 = scalar_lea.vmem [#allocation2], %s134
        // Predicated region
        $region25: #{tpu_custom_call.1} parent=23 // pred_check
          %p136 = pneg %p53
        $region26: #{tpu_custom_call.1} parent=23 // pred_check_branch
          %138 = sbr.rel (%p136) target = $region28
        $region27: #{tpu_custom_call.1} parent=23 // pred_region
          %140 = dma.done %s132, 512
        $region28: #{tpu_custom_call.1} parent=23 // pred_fallthru
          _
        %s141 = sand.u32 %s40, 1
        %s142 = scalar_lea.sflag [#allocation3], %s141
        %s143 = sand.u32 %s40, 1
        %s144 = smul.addr %s143, 32
        %s145 = scalar_lea.vmem [#allocation2], %s144
        %p146 = pneg %p53
        %p147 = pneg %p50
        %p148 = pneg %p81
        %p149 = pneg %p78
        %s150 = sand.u32 %s68, 1
        %s151 = scalar_lea.sflag [#allocation4], %s150
        %s152 = sand.u32 %s68, 1
        %s153 = smul.addr %s152, 4
        %s154 = scalar_lea.vmem [#allocation5], %s153
        %s155 = smul.u32 2, %s23
        %s156 = smul.u32 2, %s23
        %v157 = vld [vmem:[%s135] sm:$0xff]
        %v158 = vld [vmem:[%s135 + $0x8] sm:$0xff]
        %v159 = vld [vmem:[%s135 + $0x10] sm:$0xff]
        %v160 = vld [vmem:[%s135 + $0x18] sm:$0xff]
        %v161 = vadd.f32 %v157, %v159
        %v162 = vrot.slane %v161, 4
        %v163 = vadd.f32 %v161, %v162
        %v164 = vrot.slane %v163, 2
        %v165 = vadd.f32 %v163, %v164
        %v166 = vrot.slane %v165, 1
        %v167 = vadd.f32 %v165, %v166
        %v168 = vadd.f32 %v158, %v160
        %v169 = vrot.slane %v168, 4
        %v170 = vadd.f32 %v168, %v169
        %v171 = vrot.slane %v170, 2
        %v172 = vadd.f32 %v170, %v171
        %v173 = vrot.slane %v172, 1
        %v174 = vadd.f32 %v172, %v173
        %v175 = vrcp.pop 16.0
        %v176 = vmul.f32 16.0, %v175
        %v177 = vsub.f32 1.0, %v176
        %v178 = vmul.f32 %v175, %v177
        %v179 = vadd.f32 %v175, %v178
        %vm180 = vweird.f32 %v175
        %v181 = vsel %vm180, %v175, %v179
        %v182 = vmul.f32 %v167, %v181
        %v183 = vmul.f32 %v174, %v181
        %v184 = vsub.f32 %v157, %v182
        %v185 = vsub.f32 %v158, %v183
        %v186 = vsub.f32 %v159, %v182
        %v187 = vsub.f32 %v160, %v183
        %v188 = vmul.f32 %v184, %v184
        %v189 = vmul.f32 %v185, %v185
        %v190 = vmul.f32 %v186, %v186
        %v191 = vmul.f32 %v187, %v187
        %v192 = vadd.f32 %v188, %v190
        %v193 = vrot.slane %v192, 4
        %v194 = vadd.f32 %v192, %v193
        %v195 = vrot.slane %v194, 2
        %v196 = vadd.f32 %v194, %v195
        %v197 = vrot.slane %v196, 1
        %v198 = vadd.f32 %v196, %v197
        %v199 = vadd.f32 %v189, %v191
        %v200 = vrot.slane %v199, 4
        %v201 = vadd.f32 %v199, %v200
        %v202 = vrot.slane %v201, 2
        %v203 = vadd.f32 %v201, %v202
        %v204 = vrot.slane %v203, 1
        %v205 = vadd.f32 %v203, %v204
        %v206 = vmul.f32 %v198, %v181
        %v207 = vmul.f32 %v205, %v181
        %v208 = vadd.f32 %v206, 1e-05
        %v209 = vadd.f32 %v207, 1e-05
        %v210 = vrsqrt.pop %v208
        %v211 = vmul.f32 %v210, %v208
        %v212 = vmul.f32 %v211, %v210
        %v213 = vmul.f32 0.5, %v212
        %v214 = vsub.f32 1.5, %v213
        %v215 = vmul.f32 %v210, %v214
        %vm216 = vweird.f32 %v208
        %vm217 = vweird.f32 %v210
        %vm218 = vmor %vm216, %vm217
        %v219 = vsel %vm218, %v210, %v215
        %v220 = vrsqrt.pop %v209
        %v221 = vmul.f32 %v220, %v209
        %v222 = vmul.f32 %v221, %v220
        %v223 = vmul.f32 0.5, %v222
        %v224 = vsub.f32 1.5, %v223
        %v225 = vmul.f32 %v220, %v224
        %vm226 = vweird.f32 %v209
        %vm227 = vweird.f32 %v220
        %vm228 = vmor %vm226, %vm227
        %v229 = vsel %vm228, %v220, %v225
        %vm230 = vcmask 1040384
        %v231 = vsel %vm230, %v182, %v219
        %v232 = vsel %vm230, %v183, %v229
        %v235 = vrot.slane %v232, 6
        %vm236 = vcmask 1041408
        %v237 = vsel %vm236, %v231, %v235
        %239 = vst [vmem:[%s154] sm:$0xf] %v237
        %s240 = sand.u32 %s68, 1
        %s241 = scalar_lea.sflag [#allocation4], %s240
        %s242 = sand.u32 %s68, 1
        %s243 = smul.addr %s242, 4
        %s244 = scalar_lea.vmem [#allocation5], %s243
        // Predicated region
        $region29: #{tpu_custom_call.1} parent=23 // pred_check
          %p245 = pneg %p78
        $region30: #{tpu_custom_call.1} parent=23 // pred_check_branch
          %247 = sbr.rel (%p245) target = $region32
        $region31: #{tpu_custom_call.1} parent=23 // pred_region
          %s248 = smul.u32 2, %s23
          %250 = vsyncadd %s241, 0
          %s251 = smul.addr %s22, 2
          %s252 = sadd.s32 %s248, %s251
          %s253 = smul.addr %s252, 2
          %s254 = scalar_lea.hbm %s1, %s253
          %s256 = sshll.u32 %s244, 4
          %s257 = int_to_ptr.vmem [resolvable:$true] %s256
          %s258 = sshll.u32 %s254, 4
          %s259 = int_to_ptr.hbm [resolvable:$true] %s258
          %261 = dma.vmem_to_hbm [thread:$0]  %s257, 64, %s259, %s241
        $region32: #{tpu_custom_call.1} parent=23 // pred_fallthru
          _
      $region24: #{tpu_custom_call.1} parent=5 // pred_fallthru
        _
      %p262 = scmp.le.s32.totalorder 2, %s13
      // Predicated region
      $region33: #{tpu_custom_call.1} parent=5 // pred_check
        %p263 = pneg %p262
      $region34: #{tpu_custom_call.1} parent=5 // pred_check_branch
        %265 = sbr.rel (%p263) target = $region36
      $region35: #{tpu_custom_call.1} parent=5 // pred_region
        %s266 = ssub.s32 %s13, 2
        // Predicated region
        $region37: #{tpu_custom_call.1} parent=35 // pred_check
          %p267 = pneg %p84
        $region38: #{tpu_custom_call.1} parent=35 // pred_check_branch
          %269 = sbr.rel (%p267) target = $region40
        $region39: #{tpu_custom_call.1} parent=35 // pred_region
          %s270 = sand.u32 %s69, 1
          %s271 = scalar_lea.sflag [#allocation4], %s270
          %s272 = sand.u32 %s69, 1
          %s273 = smul.addr %s272, 4
          %s274 = scalar_lea.vmem [#allocation5], %s273
          %276 = dma.done %s271, 64
        $region40: #{tpu_custom_call.1} parent=35 // pred_fallthru
          _
      $region36: #{tpu_custom_call.1} parent=5 // pred_fallthru
        _
    $region6: #{tpu_custom_call.1} parent=1 // loop_footer
      %s17 = sadd.s32 1, %s13
    $region7: #{tpu_custom_call.1} parent=1 // loop_footer_branch
      %12 = sbr.rel target = $region3
    $region8: #{tpu_custom_call.1} parent=1 // loop_exit
      _
    %277 = vsyncpa [#allocation3], 1
    %s278 = scalar_lea.sflag [#allocation3], 1
    %279 = vsyncpa %s278, 1
    %280 = vsyncpa [#allocation4], 1
    %s281 = scalar_lea.sflag [#allocation4], 1
    %282 = vsyncpa %s281, 1

</llo_original>
